<compile_context>
chip_gen: v7x
topology: tpu7x:2x2x1
jax: 0.10.0
libtpu: 0.0.40
codegen_flags: <defaults>
</compile_context>

<pallas_src>
import jax
import jax.numpy as jnp
from jax.experimental import pallas as pl
from jax.experimental.pallas import tpu as pltpu

IN_FEATURES = 100 * 100          # 10000
OUT_FEATURES = 2
SUBLANES = 8
K_FOLD = IN_FEATURES // SUBLANES  # 1250


def linear_sigmoid_kernel(x_ref, wt_ref, b_ref, o_ref):
    # x_ref : (TB, 8, 1250) f32 VMEM  -- K folded onto (sublane, lane): dense vregs
    # wt_ref: (N , 8, 1250) f32 VMEM  -- PyTorch (out, in) weight, same fold
    # b_ref : (N,)          f32 SMEM  -- scalar bias reads, no VMEM tile / DMA
    # o_ref : (TB, N)       f32 VMEM
    x = x_ref[...]
    n_out = o_ref.shape[-1]
    for n in range(n_out):                           # N == 2: static unroll
        w_n = wt_ref[n]                              # (8, 1250) static index
        prod = x * w_n                               # VPU multiply (bcast over batch)
        acc = jnp.sum(prod, axis=2)                  # (TB, 8)  lane-axis reduce (XLU)
        col = jnp.sum(acc, axis=1, keepdims=True)    # (TB, 1)  sublane reduce
        o_ref[:, n:n + 1] = jax.nn.sigmoid(col + b_ref[n])   # per-column store


def linear_sigmoid(x, w, b, *, batch_tile=128):
    """y = sigmoid(x @ w.T + b) as one Pallas TPU kernel.

    x: (B, 10000) f32, w: (2, 10000) f32 (PyTorch nn.Linear layout), b: (2,) f32.
    Batch is tiled on a 1-D parallel grid; weights stay VMEM-resident and bias
    lives in SMEM. The contraction runs on the VPU/XLU (MXU would be <0.1%
    utilized at N=2).
    """
    B, K = x.shape
    N, Kw = w.shape
    assert K == Kw == IN_FEATURES and b.shape == (N,)

    # Free, contiguous reshapes: fold K onto (sublane, lane).
    xf = x.reshape(B, SUBLANES, K_FOLD)
    wf = w.reshape(N, SUBLANES, K_FOLD)

    tb = min(B, batch_tile)
    grid = (pl.cdiv(B, tb),)

    return pl.pallas_call(
        linear_sigmoid_kernel,
        out_shape=jax.ShapeDtypeStruct((B, N), jnp.float32),
        grid=grid,
        in_specs=[
            pl.BlockSpec((tb, SUBLANES, K_FOLD), lambda i: (i, 0, 0)),   # x tile
            pl.BlockSpec((N, SUBLANES, K_FOLD), lambda i: (0, 0, 0)),    # w resident
            pl.BlockSpec(memory_space=pltpu.MemorySpace.SMEM),           # bias scalars
        ],
        out_specs=pl.BlockSpec((tb, N), lambda i: (i, 0)),
        compiler_params=pltpu.CompilerParams(
            dimension_semantics=("parallel",),
        ),
    )(xf, wf, b)


def init_params(key):
    """Deterministic init mimicking torch.nn.Linear defaults:
    U(-1/sqrt(fan_in), 1/sqrt(fan_in)) for both weight and bias.
    Weight kept in PyTorch's (out_features, in_features) layout."""
    kw, kb = jax.random.split(key)
    bound = 1.0 / (IN_FEATURES ** 0.5)
    w = jax.random.uniform(
        kw, (OUT_FEATURES, IN_FEATURES), jnp.float32, minval=-bound, maxval=bound
    )
    b = jax.random.uniform(
        kb, (OUT_FEATURES,), jnp.float32, minval=-bound, maxval=bound
    )
    return w, b


if __name__ == "__main__":
    key = jax.random.PRNGKey(0)
    k_x, k_p = jax.random.split(key)

    batch = 2
    x = jax.random.normal(k_x, (batch, IN_FEATURES), jnp.float32)
    w, b = init_params(k_p)

    out = jax.block_until_ready(linear_sigmoid(x, w, b))

    # sanity check against plain JAX reference
    ref = jax.nn.sigmoid(x @ w.T + b)
    assert out.shape == (batch, OUT_FEATURES)
    assert jnp.allclose(out, ref, atol=1e-5, rtol=1e-5)

    print("KERNEL_OK")
</pallas_src>

<mosaic_0001>
module attributes {stable_mosaic.version = 11 : i64} {
  func.func @linear_sigmoid_kernel(%arg0: i32, %arg1: memref<2x8x1250xf32, #tpu.memory_space<vmem>>, %arg2: memref<2x8x1250xf32, #tpu.memory_space<vmem>>, %arg3: memref<2xf32, #tpu.memory_space<smem>>, %arg4: memref<2x2xf32, #tpu.memory_space<vmem>>) attributes {dimension_semantics = [#tpu.dimension_semantics<parallel>], iteration_bounds = array<i64: 1>, scalar_prefetch = 0 : i64, scratch_operands = 0 : i64, tpu.core_type = #tpu.core_type<tc>, window_params = [{transform_indices = @transform_0, window_bounds = array<i64: 2, 8, 1250>}, {pipeline_mode = #tpu.pipeline_mode<synchronous>, transform_indices = @transform_1, window_bounds = array<i64: 2, 8, 1250>}, {transform_indices = @transform_2, window_bounds = array<i64: 2>}, {transform_indices = @transform_3, window_bounds = array<i64: 2, 2>}]} {
    %c0 = arith.constant 0 : index
    %c0_0 = arith.constant 0 : index
    %c0_1 = arith.constant 0 : index
    %0 = vector.load %arg1[%c0, %c0_0, %c0_1] : memref<2x8x1250xf32, #tpu.memory_space<vmem>>, vector<2x8x1250xf32>
    %c0_2 = arith.constant 0 : index
    %c0_3 = arith.constant 0 : index
    %c0_4 = arith.constant 0 : index
    %1 = vector.load %arg2[%c0_2, %c0_3, %c0_4] : memref<2x8x1250xf32, #tpu.memory_space<vmem>>, vector<1x8x1250xf32>
    %2 = vector.shape_cast %1 : vector<1x8x1250xf32> to vector<8x1250xf32>
    %3 = vector.shape_cast %2 : vector<8x1250xf32> to vector<1x8x1250xf32>
    %4 = vector.broadcast %3 : vector<1x8x1250xf32> to vector<2x8x1250xf32>
    %5 = arith.mulf %0, %4 : vector<2x8x1250xf32>
    %cst = arith.constant dense<0.000000e+00> : vector<2x8xf32>
    %6 = vector.multi_reduction <add>, %5, %cst [2] : vector<2x8x1250xf32> to vector<2x8xf32>
    %cst_5 = arith.constant dense<0.000000e+00> : vector<2xf32>
    %7 = vector.multi_reduction <add>, %6, %cst_5 [1] : vector<2x8xf32> to vector<2xf32>
    %8 = vector.shape_cast %7 : vector<2xf32> to vector<2x1xf32>
    %c0_6 = arith.constant 0 : index
    %9 = memref.load %arg3[%c0_6] : memref<2xf32, #tpu.memory_space<smem>>
    %10 = vector.broadcast %9 : f32 to vector<2x1xf32>
    %11 = arith.addf %8, %10 : vector<2x1xf32>
    %12 = arith.negf %11 : vector<2x1xf32>
    %13 = math.exp %12 : vector<2x1xf32>
    %cst_7 = arith.constant 1.000000e+00 : f32
    %14 = vector.broadcast %cst_7 : f32 to vector<2x1xf32>
    %15 = arith.addf %14, %13 : vector<2x1xf32>
    %16 = arith.divf %14, %15 : vector<2x1xf32>
    %c0_8 = arith.constant 0 : index
    %c0_9 = arith.constant 0 : index
    %17 = vector.load %arg4[%c0_8, %c0_9] : memref<2x2xf32, #tpu.memory_space<vmem>>, vector<2x1xf32>
    tpu.vector_store %arg4[%c0_8, %c0_9], %16 {strides = array<i32>} : memref<2x2xf32, #tpu.memory_space<vmem>>, vector<2x1xf32>,
    %c1 = arith.constant 1 : index
    %c0_10 = arith.constant 0 : index
    %c0_11 = arith.constant 0 : index
    %18 = vector.load %arg2[%c1, %c0_10, %c0_11] : memref<2x8x1250xf32, #tpu.memory_space<vmem>>, vector<1x8x1250xf32>
    %19 = vector.shape_cast %18 : vector<1x8x1250xf32> to vector<8x1250xf32>
    %20 = vector.shape_cast %19 : vector<8x1250xf32> to vector<1x8x1250xf32>
    %21 = vector.broadcast %20 : vector<1x8x1250xf32> to vector<2x8x1250xf32>
    %22 = arith.mulf %0, %21 : vector<2x8x1250xf32>
    %cst_12 = arith.constant dense<0.000000e+00> : vector<2x8xf32>
    %23 = vector.multi_reduction <add>, %22, %cst_12 [2] : vector<2x8x1250xf32> to vector<2x8xf32>
    %cst_13 = arith.constant dense<0.000000e+00> : vector<2xf32>
    %24 = vector.multi_reduction <add>, %23, %cst_13 [1] : vector<2x8xf32> to vector<2xf32>
    %25 = vector.shape_cast %24 : vector<2xf32> to vector<2x1xf32>
    %c1_14 = arith.constant 1 : index
    %26 = memref.load %arg3[%c1_14] : memref<2xf32, #tpu.memory_space<smem>>
    %27 = vector.broadcast %26 : f32 to vector<2x1xf32>
    %28 = arith.addf %25, %27 : vector<2x1xf32>
    %29 = arith.negf %28 : vector<2x1xf32>
    %30 = math.exp %29 : vector<2x1xf32>
    %cst_15 = arith.constant 1.000000e+00 : f32
    %31 = vector.broadcast %cst_15 : f32 to vector<2x1xf32>
    %32 = arith.addf %31, %30 : vector<2x1xf32>
    %33 = arith.divf %31, %32 : vector<2x1xf32>
    %c0_16 = arith.constant 0 : index
    %c1_17 = arith.constant 1 : index
    %34 = vector.load %arg4[%c0_16, %c1_17] : memref<2x2xf32, #tpu.memory_space<vmem>>, vector<2x1xf32>
    tpu.vector_store %arg4[%c0_16, %c1_17], %33 {strides = array<i32>} : memref<2x2xf32, #tpu.memory_space<vmem>>, vector<2x1xf32>,
    return
  }
  func.func @transform_0(%arg0: i32) -> (i32, i32, i32) {
    %c0_i32 = arith.constant 0 : i32
    %c0_i32_0 = arith.constant 0 : i32
    %c0_i32_1 = arith.constant 0 : i32
    return %arg0, %c0_i32, %c0_i32_0 : i32, i32, i32
  }
  func.func @transform_1(%arg0: i32) -> (i32, i32, i32) {
    %c0_i32 = arith.constant 0 : i32
    %c0_i32_0 = arith.constant 0 : i32
    %c0_i32_1 = arith.constant 0 : i32
    %c0_i32_2 = arith.constant 0 : i32
    return %c0_i32, %c0_i32_0, %c0_i32_1 : i32, i32, i32
  }
  func.func @transform_2(%arg0: i32) -> i32 {
    %c0_i32 = arith.constant 0 : i32
    %c0_i32_0 = arith.constant 0 : i32
    return %c0_i32 : i32
  }
  func.func @transform_3(%arg0: i32) -> (i32, i32) {
    %c0_i32 = arith.constant 0 : i32
    %c0_i32_0 = arith.constant 0 : i32
    return %arg0, %c0_i32 : i32, i32
  }
}

</mosaic_0001>

<llo_original>
// kernel: tpu_custom_call.1
$region0: #{tpu_custom_call.1}
  #allocation0 [shape = 'u32[]', space=smem, size = 0x4, offset = 0x4, fixed_abs, tag = 'smem constant byte address 0x4 - core index']
  #allocation1 [shape = 'u32[144,128]{1,0:T(1,128)}', space=vmem, size = 0x12000, scoped, tag = 'internal scratch']
  %s0 = inlined_call_operand.hbm [shape: f32[2,8,1250], index: 0, kind: input, shape index: {}]
  %s1 = inlined_call_operand.hbm [shape: f32[2,8,1250], index: 1, kind: input, shape index: {}]
  %s2 = inlined_call_operand.vmem [shape: f32[2], index: 2, kind: input, shape index: {}]
  %s3 = inlined_call_operand.hbm [shape: f32[2,2], index: 3, kind: output, shape index: {}]
  %s4 = sld [smem:[#allocation0]]
  $region34: #{tpu_custom_call.1} parent=0
    _
  %s6 = ssub.s32 1, %s4
  %s7 = scalar_select 0, %s6, %s4
  $region1: #{tpu_custom_call.1} parent=0
    #allocation2 [shape = 'u8[81920]{0}', space=vmem, size = 0x14000, scoped, tag = 'input window, operand 0, single buffered']
    #allocation3 [shape = 's32[1]{0}', space=sflag, size = 0x4, scoped, tag = 'scoped memory for tpu_custom_call.1']
    #allocation4 [shape = 's32[1]{0}', space=sflag, size = 0x4, scoped, tag = 'scoped memory for tpu_custom_call.1']
    #allocation5 [shape = 's32[1]{0}', space=sflag, size = 0x4, scoped, tag = 'scoped memory for tpu_custom_call.1']
    #allocation6 [shape = 'u8[81920]{0}', space=vmem, size = 0x14000, scoped, tag = 'input window, operand 1, single buffered']
    #allocation7 [shape = 's32[1]{0}', space=sflag, size = 0x4, scoped, tag = 'scoped memory for tpu_custom_call.1']
    #allocation8 [shape = 'u8[512]{0}', space=smem, size = 0x200, scoped, tag = 'input window, operand 2, single buffered']
    #allocation9 [shape = 'u8[1024]{0}', space=vmem, size = 0x400, scoped, tag = 'output window, operand 0, single buffered']
    %8 = vsyncpa [#allocation3], 0
    %9 = vsyncpa [#allocation7], 0
    %10 = vsyncpa [#allocation5], 0
    %11 = vsyncpa [#allocation4], 0
    // Predicated region
    $region2: #{tpu_custom_call.1} parent=1 // pred_check
      _
    $region3: #{tpu_custom_call.1} parent=1 // pred_check_branch
      %13 = sbr.rel (0) target = $region5
    $region4: #{tpu_custom_call.1} parent=1 // pred_region
      %s15 = ssub.s32 2560, 2560
      %16 = vsyncadd [#allocation3], %s15
      %s17 = sshll.u32 [#allocation2], 4
      %s18 = int_to_ptr.vmem [resolvable:$true] %s17
      %23 = dma.hbm_to_vmem [thread:$0]  %s0, 2560, %s18, [#allocation3], 1280, 1280, 80
    $region5: #{tpu_custom_call.1} parent=1 // pred_fallthru
      _
    // Predicated region
    $region6: #{tpu_custom_call.1} parent=1 // pred_check
      _
    $region7: #{tpu_custom_call.1} parent=1 // pred_check_branch
      %25 = sbr.rel (0) target = $region9
    $region8: #{tpu_custom_call.1} parent=1 // pred_region
      %s27 = ssub.s32 2560, 2560
      %28 = vsyncadd [#allocation7], %s27
      %s29 = sshll.u32 [#allocation6], 4
      %s30 = int_to_ptr.vmem [resolvable:$true] %s29
      %35 = dma.hbm_to_vmem [thread:$0]  %s1, 2560, %s30, [#allocation7], 1280, 1280, 80
    $region9: #{tpu_custom_call.1} parent=1 // pred_fallthru
      _
    // Predicated region
    $region10: #{tpu_custom_call.1} parent=1 // pred_check
      _
    $region11: #{tpu_custom_call.1} parent=1 // pred_check_branch
      %37 = sbr.rel (0) target = $region13
    $region12: #{tpu_custom_call.1} parent=1 // pred_region
      %s39 = ssub.s32 16, 16
      %40 = vsyncadd [#allocation5], %s39
      %s42 = sshll.u32 %s2, 4
      %s43 = int_to_ptr.vmem [resolvable:$true] %s42
      %45 = dma.vmem_to_smem %s43, 16, [#allocation8], [#allocation5]
    $region13: #{tpu_custom_call.1} parent=1 // pred_fallthru
      _
    // Predicated region
    $region14: #{tpu_custom_call.1} parent=1 // pred_check
      _
    $region15: #{tpu_custom_call.1} parent=1 // pred_check_branch
      %47 = sbr.rel (0) target = $region17
    $region16: #{tpu_custom_call.1} parent=1 // pred_region
      %48 = dma.done [#allocation3], 2560
    $region17: #{tpu_custom_call.1} parent=1 // pred_fallthru
      _
    // Predicated region
    $region18: #{tpu_custom_call.1} parent=1 // pred_check
      _
    $region19: #{tpu_custom_call.1} parent=1 // pred_check_branch
      %50 = sbr.rel (0) target = $region21
    $region20: #{tpu_custom_call.1} parent=1 // pred_region
      %51 = dma.done [#allocation7], 2560
    $region21: #{tpu_custom_call.1} parent=1 // pred_fallthru
      _
    // Predicated region
    $region22: #{tpu_custom_call.1} parent=1 // pred_check
      _
    $region23: #{tpu_custom_call.1} parent=1 // pred_check_branch
      %53 = sbr.rel (0) target = $region25
    $region24: #{tpu_custom_call.1} parent=1 // pred_region
      %54 = dma.done [#allocation5], 16
    $region25: #{tpu_custom_call.1} parent=1 // pred_fallthru
      _
    %55 = sfence
    %v56 = vld [vmem:[#allocation2] sm:$0xff]
    %v57 = vld [vmem:[#allocation2 + $0x8] sm:$0xff]
    %v58 = vld [vmem:[#allocation2 + $0x10] sm:$0xff]
    %v59 = vld [vmem:[#allocation2 + $0x18] sm:$0xff]
    %v60 = vld [vmem:[#allocation2 + $0x20] sm:$0xff]
    %v61 = vld [vmem:[#allocation2 + $0x28] sm:$0xff]
    %v62 = vld [vmem:[#allocation2 + $0x30] sm:$0xff]
    %v63 = vld [vmem:[#allocation2 + $0x38] sm:$0xff]
    %v64 = vld [vmem:[#allocation2 + $0x40] sm:$0xff]
    %v65 = vld [vmem:[#allocation2 + $0x48] sm:$0xff]
    %v66 = vld [vmem:[#allocation2 + $0x50] sm:$0xff]
    %v67 = vld [vmem:[#allocation2 + $0x58] sm:$0xff]
    %v68 = vld [vmem:[#allocation2 + $0x60] sm:$0xff]
    %v69 = vld [vmem:[#allocation2 + $0x68] sm:$0xff]
    %v70 = vld [vmem:[#allocation2 + $0x70] sm:$0xff]
    %v71 = vld [vmem:[#allocation2 + $0x78] sm:$0xff]
    %v72 = vld [vmem:[#allocation2 + $0x80] sm:$0xff]
    %v73 = vld [vmem:[#allocation2 + $0x88] sm:$0xff]
    %v74 = vld [vmem:[#allocation2 + $0x90] sm:$0xff]
    %v75 = vld [vmem:[#allocation2 + $0x98] sm:$0xff]
    %v76 = vld [vmem:[#allocation6] sm:$0xff]
    %v77 = vld [vmem:[#allocation6 + $0x8] sm:$0xff]
    %v78 = vld [vmem:[#allocation6 + $0x10] sm:$0xff]
    %v79 = vld [vmem:[#allocation6 + $0x18] sm:$0xff]
    %v80 = vld [vmem:[#allocation6 + $0x20] sm:$0xff]
    %v81 = vld [vmem:[#allocation6 + $0x28] sm:$0xff]
    %v82 = vld [vmem:[#allocation6 + $0x30] sm:$0xff]
    %v83 = vld [vmem:[#allocation6 + $0x38] sm:$0xff]
    %v84 = vld [vmem:[#allocation6 + $0x40] sm:$0xff]
    %v85 = vld [vmem:[#allocation6 + $0x48] sm:$0xff]
    %v86 = vmul.f32 %v56, %v76
    %v87 = vmul.f32 %v57, %v77
    %v88 = vmul.f32 %v58, %v78
    %v89 = vmul.f32 %v59, %v79
    %v90 = vmul.f32 %v60, %v80
    %v91 = vmul.f32 %v61, %v81
    %v92 = vmul.f32 %v62, %v82
    %v93 = vmul.f32 %v63, %v83
    %v94 = vmul.f32 %v64, %v84
    %v95 = vmul.f32 %v65, %v85
    %v96 = vmul.f32 %v66, %v76
    %v97 = vmul.f32 %v67, %v77
    %v98 = vmul.f32 %v68, %v78
    %v99 = vmul.f32 %v69, %v79
    %v100 = vmul.f32 %v70, %v80
    %v101 = vmul.f32 %v71, %v81
    %v102 = vmul.f32 %v72, %v82
    %v103 = vmul.f32 %v73, %v83
    %v104 = vmul.f32 %v74, %v84
    %v105 = vmul.f32 %v75, %v85
    %v106 = vadd.f32 %v86, %v87
    %v107 = vadd.f32 %v106, %v88
    %v108 = vadd.f32 %v107, %v89
    %v109 = vadd.f32 %v108, %v90
    %v110 = vadd.f32 %v109, %v91
    %v111 = vadd.f32 %v110, %v92
    %v112 = vadd.f32 %v111, %v93
    %v113 = vadd.f32 %v112, %v94
    %vm114 = vcmask 801792
    %v115 = vsel %vm114, %v95, 0.0
    %v116 = vadd.f32 %v113, %v115
    %117 = vadd.xlane.f32.xlu0 %v116
    %v118 = vpop.xlane.xlu0 %117
    %v119 = vadd.f32 %v96, %v97
    %v120 = vadd.f32 %v119, %v98
    %v121 = vadd.f32 %v120, %v99
    %v122 = vadd.f32 %v121, %v100
    %v123 = vadd.f32 %v122, %v101
    %v124 = vadd.f32 %v123, %v102
    %v125 = vadd.f32 %v124, %v103
    %v126 = vadd.f32 %v125, %v104
    %v127 = vsel %vm114, %v105, 0.0
    %v128 = vadd.f32 %v126, %v127
    %129 = vadd.xlane.f32.xlu0 %v128
    %v130 = vpop.xlane.xlu0 %129
    %v133 = vlaneseq
    %v134 = vand.u32 %v133, 127
    %v135 = vlaneseq
    %v136 = vshrl.u32 %v135, 7
    %v137 = vsub.s32 %v134, %v136
    %v138 = vrot.slane %v118, %v137
    %v139 = vlaneseq
    %v140 = vshrl.u32 %v139, 7
    %v141 = vsub.s32 %v134, %v140
    %v142 = vrot.slane %v130, %v141
    %vm143 = vcmask 1041409
    %v144 = vsel %vm143, %v142, %v138
    %vm146 = vcmask 58368
    %v147 = vsel %vm146, %v144, 0.0
    %148 = vadd.xlane.f32.xlu0 %v147
    %v149 = vpop.xlane.xlu0 %148
    %s150 = sld [smem:[#allocation8]]
    %v151 = vstv %s150
    %v152 = vadd.f32 %v149, %v151
    %v153 = vxor.u32 %v152, 2147483648
    %v154 = vmul.f32 %v153, 1.442695
    %v155 = vpow.pop %v154
    %v156 = vadd.f32 %v155, 1.0
    %v157 = vrcp.pop %v156
    %v158 = vmul.f32 1.0, %v157
    %vm159 = vcmask 1024
    %160 = vst.msk [vmem:[#allocation9] sm:$0x3] %vm159, %v158
    %s161 = scalar_lea.vmem [#allocation6], 80
    %v162 = vld [vmem:[%s161] sm:$0xff]
    %v163 = vld [vmem:[%s161 + $0x8] sm:$0xff]
    %v164 = vld [vmem:[%s161 + $0x10] sm:$0xff]
    %v165 = vld [vmem:[%s161 + $0x18] sm:$0xff]
    %v166 = vld [vmem:[%s161 + $0x20] sm:$0xff]
    %v167 = vld [vmem:[%s161 + $0x28] sm:$0xff]
    %v168 = vld [vmem:[%s161 + $0x30] sm:$0xff]
    %v169 = vld [vmem:[%s161 + $0x38] sm:$0xff]
    %v170 = vld [vmem:[%s161 + $0x40] sm:$0xff]
    %v171 = vld [vmem:[%s161 + $0x48] sm:$0xff]
    %v172 = vmul.f32 %v56, %v162
    %v173 = vmul.f32 %v57, %v163
    %v174 = vmul.f32 %v58, %v164
    %v175 = vmul.f32 %v59, %v165
    %v176 = vmul.f32 %v60, %v166
    %v177 = vmul.f32 %v61, %v167
    %v178 = vmul.f32 %v62, %v168
    %v179 = vmul.f32 %v63, %v169
    %v180 = vmul.f32 %v64, %v170
    %v181 = vmul.f32 %v65, %v171
    %v182 = vmul.f32 %v66, %v162
    %v183 = vmul.f32 %v67, %v163
    %v184 = vmul.f32 %v68, %v164
    %v185 = vmul.f32 %v69, %v165
    %v186 = vmul.f32 %v70, %v166
    %v187 = vmul.f32 %v71, %v167
    %v188 = vmul.f32 %v72, %v168
    %v189 = vmul.f32 %v73, %v169
    %v190 = vmul.f32 %v74, %v170
    %v191 = vmul.f32 %v75, %v171
    %v192 = vadd.f32 %v172, %v173
    %v193 = vadd.f32 %v192, %v174
    %v194 = vadd.f32 %v193, %v175
    %v195 = vadd.f32 %v194, %v176
    %v196 = vadd.f32 %v195, %v177
    %v197 = vadd.f32 %v196, %v178
    %v198 = vadd.f32 %v197, %v179
    %v199 = vadd.f32 %v198, %v180
    %v200 = vsel %vm114, %v181, 0.0
    %v201 = vadd.f32 %v199, %v200
    %202 = vadd.xlane.f32.xlu0 %v201
    %v203 = vpop.xlane.xlu0 %202
    %v204 = vadd.f32 %v182, %v183
    %v205 = vadd.f32 %v204, %v184
    %v206 = vadd.f32 %v205, %v185
    %v207 = vadd.f32 %v206, %v186
    %v208 = vadd.f32 %v207, %v187
    %v209 = vadd.f32 %v208, %v188
    %v210 = vadd.f32 %v209, %v189
    %v211 = vadd.f32 %v210, %v190
    %v212 = vsel %vm114, %v191, 0.0
    %v213 = vadd.f32 %v211, %v212
    %214 = vadd.xlane.f32.xlu0 %v213
    %v215 = vpop.xlane.xlu0 %214
    %v218 = vlaneseq
    %v219 = vshrl.u32 %v218, 7
    %v220 = vsub.s32 %v134, %v219
    %v221 = vrot.slane %v203, %v220
    %v222 = vlaneseq
    %v223 = vshrl.u32 %v222, 7
    %v224 = vsub.s32 %v134, %v223
    %v225 = vrot.slane %v215, %v224
    %v226 = vsel %vm143, %v225, %v221
    %v228 = vsel %vm146, %v226, 0.0
    %229 = vadd.xlane.f32.xlu0 %v228
    %v230 = vpop.xlane.xlu0 %229
    %s231 = sld [smem:[#allocation8 + $0x1]]
    %v232 = vstv %s231
    %v233 = vadd.f32 %v230, %v232
    %v234 = vxor.u32 %v233, 2147483648
    %v235 = vmul.f32 %v234, 1.442695
    %v236 = vpow.pop %v235
    %v237 = vadd.f32 %v236, 1.0
    %v238 = vrcp.pop %v237
    %v239 = vmul.f32 1.0, %v238
    %vm240 = vcmask 9224
    %241 = vst.msk [vmem:[#allocation9] sm:$0x3] %vm240, %v239
    // Predicated region
    $region26: #{tpu_custom_call.1} parent=1 // pred_check
      _
    $region27: #{tpu_custom_call.1} parent=1 // pred_check_branch
      %243 = sbr.rel (0) target = $region29
    $region28: #{tpu_custom_call.1} parent=1 // pred_region
      %s245 = ssub.s32 32, 32
      %246 = vsyncadd [#allocation4], %s245
      %s248 = sshll.u32 [#allocation9], 4
      %s249 = int_to_ptr.vmem [resolvable:$true] %s248
      %251 = dma.vmem_to_hbm [thread:$0]  %s249, 32, %s3, [#allocation4]
    $region29: #{tpu_custom_call.1} parent=1 // pred_fallthru
      _
    // Predicated region
    $region30: #{tpu_custom_call.1} parent=1 // pred_check
      _
    $region31: #{tpu_custom_call.1} parent=1 // pred_check_branch
      %253 = sbr.rel (0) target = $region33
    $region32: #{tpu_custom_call.1} parent=1 // pred_region
      %254 = dma.done [#allocation4], 32
    $region33: #{tpu_custom_call.1} parent=1 // pred_fallthru
      _
    %255 = vsyncpa [#allocation3], 1
    %256 = vsyncpa [#allocation7], 1
    %257 = vsyncpa [#allocation4], 1
    %258 = vsyncpa [#allocation5], 1

</llo_original>
